<compile_context>
chip_gen: v5e
topology: v5e:2x2
jax: 0.10.0
libtpu: 0.0.40
codegen_flags: <defaults>
</compile_context>

<pallas_src>
import jax
import jax.numpy as jnp
from jax.experimental import pallas as pl
from jax.experimental.pallas import tpu as pltpu


def _round_up(a, b):
    return ((a + b - 1) // b) * b


def _vmem_budget():
    """(physical VMEM per core, scoped limit to request, per-block byte target)."""
    try:
        cap = int(pltpu.get_tpu_info().vmem_capacity_bytes)
    except Exception:  # info unavailable -> assume the smallest (v7x: 64 MiB/TC)
        cap = 64 * 1024 * 1024
    limit = max(32 * 1024 * 1024, min(cap * 3 // 4, 96 * 1024 * 1024))
    target_block = max(4 * 1024 * 1024, min(16 * 1024 * 1024, limit // 4))
    return cap, limit, target_block


def _choose_tiles(n, c, hw, dtype_bytes, target_bytes):
    """Pick (tn, c_tile, hw_tile, padded_block_bytes).

    Constraints (from the (8,128) tiling rules, applied to the input block
    (tn, c_tile, hw_tile) AND the output block (1, tn, c_tile)):
      * tn      : multiple of 8, or == n
      * c_tile  : multiple of 128 dividing c, or == c
      * hw_tile : multiple of 128, or == hw
    Block sizes are accounted with lane/sublane padding so VMEM is not
    silently over-committed.
    """
    packing = max(1, 4 // dtype_bytes)   # elements per 32-bit word
    sub = 8 * packing                    # sublane multiple for this dtype
    lane = 128

    def blk_bytes(tn, ct, ht):
        return tn * _round_up(ct, sub) * _round_up(ht, lane) * dtype_bytes

    tn_min = 8 if n % 8 == 0 else n
    if c % lane == 0:
        ct_min = lane
        ct_candidates = [d for d in range(lane, min(c, 2048) + 1, lane) if c % d == 0]
    else:
        ct_min = c
        ct_candidates = [c]

    if blk_bytes(tn_min, ct_min, hw) <= target_bytes:
        # Whole HW reduction fits in one block: grow c_tile, then tn, to cut
        # the number of grid steps (fewer steps -> less per-step overhead,
        # bigger DMAs).
        hw_tile = hw
        c_tile = ct_min
        for ct in ct_candidates:
            if blk_bytes(tn_min, ct, hw) <= target_bytes:
                c_tile = max(c_tile, ct)
        tn = tn_min
        if n % 8 == 0:
            for t in range(8, min(n, 512) + 1, 8):
                if n % t == 0 and blk_bytes(t, c_tile, hw) <= target_bytes:
                    tn = max(tn, t)
    else:
        # HW reduction spans several blocks: keep (tn, c_tile) minimal and make
        # hw_tile (the lane / DMA dimension) as large as the budget allows.
        tn, c_tile = tn_min, ct_min
        max_ht = target_bytes // (tn * _round_up(c_tile, sub) * dtype_bytes)
        hw_tile = max(lane, (max_ht // lane) * lane)

    return tn, c_tile, hw_tile, blk_bytes(tn, c_tile, hw_tile)


def _make_kernel(hw_total, hw_tile, hw_blocks, per_split, needs_mask, neg_fill):
    tail_start = hw_blocks - 1   # only blocks from here on can touch padding

    def kernel(x_ref, max_ref, sum_ref, max_acc, sum_acc):
        s = pl.program_id(0)     # HW-split (TensorCore parallel) axis
        k = pl.program_id(3)     # reduction axis (innermost, "arbitrary")

        @pl.when(k == 0)
        def _init():
            max_acc[...] = jnp.full_like(max_acc, -jnp.inf)
            sum_acc[...] = jnp.zeros_like(sum_acc)

        x = x_ref[...]           # (tn, c_tile, hw_tile) in the input dtype

        def _accumulate(x_max_src, x_sum_src):
            # One cross-lane reduce per chunk (XLU); the cross-chunk combine is
            # elementwise on the small (tn, c_tile) f32 scratch (VPU).
            max_acc[...] = jnp.maximum(
                max_acc[...], jnp.max(x_max_src, axis=-1).astype(jnp.float32))
            sum_acc[...] = sum_acc[...] + jnp.sum(x_sum_src, axis=-1,
                                                  dtype=jnp.float32)

        if needs_mask:
            blk = s * per_split + k      # global HW block index

            @pl.when(blk < tail_start)
            def _steady():               # unmasked steady-state path
                _accumulate(x, x)

            @pl.when(blk >= tail_start)
            def _tail():                 # mask lanes past hw_total
                pos = blk * hw_tile + jax.lax.broadcasted_iota(
                    jnp.int32, x.shape, 2)
                valid = pos < hw_total
                x_max_src = jnp.where(valid, x,
                                      jnp.asarray(neg_fill, dtype=x.dtype))
                x_sum_src = jnp.where(valid, x, jnp.zeros((), dtype=x.dtype))
                _accumulate(x_max_src, x_sum_src)
        else:
            _accumulate(x, x)

        @pl.when(k == pl.num_programs(3) - 1)
        def _finalize():
            max_ref[0, :, :] = max_acc[...].astype(max_ref.dtype)
            sum_ref[0, :, :] = sum_acc[...]

    return kernel


def _global_max_sum_pool(x_flat, n_rows=None):
    """Global max and sum over the last axis of (N, C, HW).

    Returns (max, sum) as float32 arrays of shape (n_rows, C).  `n_rows`
    (default: full N) lets the caller pool only the leading rows of a larger
    buffer without slicing/copying it in HBM.
    """
    n_total, c, hw = x_flat.shape
    n = n_total if n_rows is None else n_rows
    dtype = x_flat.dtype
    dtype_bytes = dtype.itemsize

    vmem_cap, vmem_limit, target_block_bytes = _vmem_budget()
    tn, c_tile, hw_tile, padded_block_bytes = _choose_tiles(
        n, c, hw, dtype_bytes, target_block_bytes)

    # Pathological shapes (huge non-lane-dense C) can exceed the block target;
    # make sure the scoped VMEM request still covers the double-buffered input.
    vmem_limit = max(vmem_limit,
                     min(vmem_cap * 9 // 10, 2 * padded_block_bytes + (8 << 20)))

    hw_blocks = pl.cdiv(hw, hw_tile)
    n_blocks = n // tn
    c_blocks = c // c_tile

    # v7x has two TensorCores; if the natural parallel grid is degenerate,
    # split the HW reduction in two and combine partial results in the wrapper
    # (max-of-max, sum-of-sum).  Harmless on single-TC v5e/v6e.
    splits = 2 if (n_blocks * c_blocks == 1 and hw_blocks >= 2
                   and hw_blocks % 2 == 0) else 1
    per_split = hw_blocks // splits

    needs_mask = (hw % hw_tile) != 0
    if jnp.issubdtype(dtype, jnp.floating):
        neg_fill = -jnp.inf
    else:
        # TODO(synk): integer inputs accumulate through f32 (not bit-exact for
        # |values| > 2^24); the metric-net use case is float activations.
        neg_fill = jnp.iinfo(dtype).min

    kernel = _make_kernel(hw, hw_tile, hw_blocks, per_split, needs_mask, neg_fill)

    in_index_map = lambda s, i, j, k: (i, j, s * per_split + k)
    out_index_map = lambda s, i, j, k: (s, i, j)

    max_out, sum_out = pl.pallas_call(
        kernel,
        out_shape=(jax.ShapeDtypeStruct((splits, n, c), jnp.float32),
                   jax.ShapeDtypeStruct((splits, n, c), jnp.float32)),
        grid_spec=pltpu.PrefetchScalarGridSpec(
            num_scalar_prefetch=0,
            grid=(splits, n_blocks, c_blocks, per_split),
            in_specs=[pl.BlockSpec((tn, c_tile, hw_tile), in_index_map)],
            out_specs=[pl.BlockSpec((1, tn, c_tile), out_index_map),
                       pl.BlockSpec((1, tn, c_tile), out_index_map)],
            scratch_shapes=[pltpu.VMEM((tn, c_tile), jnp.float32),   # running max
                            pltpu.VMEM((tn, c_tile), jnp.float32)],  # running sum
        ),
        compiler_params=pltpu.CompilerParams(
            dimension_semantics=("parallel", "parallel", "parallel", "arbitrary"),
            vmem_limit_bytes=int(vmem_limit),
        ),
    )(x_flat)

    if splits == 1:
        return max_out[0], sum_out[0]
    return jnp.max(max_out, axis=0), jnp.sum(sum_out, axis=0)


def adaptive_concat_pool2d(x):
    """x: (N, C, H, W) -> (N, 2*C, 1, 1), matching torch.cat([maxpool, avgpool], 1)."""
    n, c, h, w = x.shape
    hw = h * w
    x_flat = x.reshape(n, c, hw)

    if n % 8 == 0 or n <= 8:
        mx, sm = _global_max_sum_pool(x_flat)
    else:
        # Avoid a full-tensor pad/copy: pool the 8-aligned head directly from
        # the original buffer and only slice the (< 8 row) tail.
        n_main = (n // 8) * 8
        mx_head, sm_head = _global_max_sum_pool(x_flat, n_rows=n_main)
        mx_tail, sm_tail = _global_max_sum_pool(x_flat[n_main:])
        mx = jnp.concatenate([mx_head, mx_tail], axis=0)
        sm = jnp.concatenate([sm_head, sm_tail], axis=0)

    max_nc = mx.astype(x.dtype)
    mean_nc = (sm * (1.0 / hw)).astype(x.dtype)

    # Channel concat + the trivial (1,1) spatial dims live in the wrapper so
    # the kernel's stores stay lane-dense.
    return jnp.concatenate([max_nc, mean_nc], axis=1).reshape(n, 2 * c, 1, 1)


if __name__ == "__main__":
    key = jax.random.PRNGKey(0)
    # Small NCHW input consistent with the module's forward.
    x = jax.random.normal(key, (2, 4, 16, 16), dtype=jnp.float32)

    y = adaptive_concat_pool2d(x)
    jax.block_until_ready(y)

    # Reference check (plain JAX, same semantics as the PyTorch module).
    ref = jnp.concatenate(
        [jnp.max(x, axis=(2, 3), keepdims=True),
         jnp.mean(x, axis=(2, 3), keepdims=True)],
        axis=1,
    )
    assert y.shape == (2, 8, 1, 1), y.shape
    assert jnp.allclose(y, ref, atol=1e-5, rtol=1e-5), "mismatch vs reference"

    print("KERNEL_OK")
</pallas_src>

<mosaic_0001>
module attributes {stable_mosaic.version = 11 : i64} {
  func.func @kernel(%arg0: i32, %arg1: i32, %arg2: i32, %arg3: i32, %arg4: memref<2x4x256xf32, #tpu.memory_space<vmem>>, %arg5: memref<1x2x4xf32, #tpu.memory_space<vmem>>, %arg6: memref<1x2x4xf32, #tpu.memory_space<vmem>>, %arg7: memref<2x4xf32, #tpu.memory_space<vmem>>, %arg8: memref<2x4xf32, #tpu.memory_space<vmem>>) attributes {dimension_semantics = [#tpu.dimension_semantics<parallel>, #tpu.dimension_semantics<parallel>, #tpu.dimension_semantics<parallel>, #tpu.dimension_semantics<arbitrary>], iteration_bounds = array<i64: 1, 1, 1, 1>, scalar_prefetch = 0 : i64, scratch_operands = 2 : i64, tpu.core_type = #tpu.core_type<tc>, window_params = [{transform_indices = @transform_0, window_bounds = array<i64: 2, 4, 256>}, {transform_indices = @transform_1, window_bounds = array<i64: 1, 2, 4>}, {transform_indices = @transform_2, window_bounds = array<i64: 1, 2, 4>}]} {
    %c0_i32 = arith.constant 0 : i32
    %0 = arith.cmpi eq, %arg3, %c0_i32 : i32
    %1 = arith.extui %0 : i1 to i32
    %c0_i32_0 = arith.constant 0 : i32
    %2 = arith.cmpi ne, %1, %c0_i32_0 : i32
    scf.if %2 {
      %cst_14 = arith.constant 0xFF800000 : f32
      %15 = vector.broadcast %cst_14 : f32 to vector<2x4xf32>
      %c0_15 = arith.constant 0 : index
      %c0_16 = arith.constant 0 : index
      %16 = vector.load %arg7[%c0_15, %c0_16] : memref<2x4xf32, #tpu.memory_space<vmem>>, vector<2x4xf32>
      tpu.vector_store %arg7[%c0_15, %c0_16], %15 {strides = array<i32>} : memref<2x4xf32, #tpu.memory_space<vmem>>, vector<2x4xf32>,
      %cst_17 = arith.constant 0.000000e+00 : f32
      %17 = vector.broadcast %cst_17 : f32 to vector<2x4xf32>
      %c0_18 = arith.constant 0 : index
      %c0_19 = arith.constant 0 : index
      %18 = vector.load %arg8[%c0_18, %c0_19] : memref<2x4xf32, #tpu.memory_space<vmem>>, vector<2x4xf32>
      tpu.vector_store %arg8[%c0_18, %c0_19], %17 {strides = array<i32>} : memref<2x4xf32, #tpu.memory_space<vmem>>, vector<2x4xf32>,
    } else {
    }
    %c0 = arith.constant 0 : index
    %c0_1 = arith.constant 0 : index
    %c0_2 = arith.constant 0 : index
    %3 = vector.load %arg4[%c0, %c0_1, %c0_2] : memref<2x4x256xf32, #tpu.memory_space<vmem>>, vector<2x4x256xf32>
    %c0_3 = arith.constant 0 : index
    %c0_4 = arith.constant 0 : index
    %4 = vector.load %arg7[%c0_3, %c0_4] : memref<2x4xf32, #tpu.memory_space<vmem>>, vector<2x4xf32>
    %cst = arith.constant dense<0xFF800000> : vector<2x4xf32>
    %5 = vector.multi_reduction <maximumf>, %3, %cst [2] : vector<2x4x256xf32> to vector<2x4xf32>
    %6 = arith.maximumf %4, %5 : vector<2x4xf32>
    %c0_5 = arith.constant 0 : index
    %c0_6 = arith.constant 0 : index
    %7 = vector.load %arg7[%c0_5, %c0_6] : memref<2x4xf32, #tpu.memory_space<vmem>>, vector<2x4xf32>
    tpu.vector_store %arg7[%c0_5, %c0_6], %6 {strides = array<i32>} : memref<2x4xf32, #tpu.memory_space<vmem>>, vector<2x4xf32>,
    %c0_7 = arith.constant 0 : index
    %c0_8 = arith.constant 0 : index
    %8 = vector.load %arg8[%c0_7, %c0_8] : memref<2x4xf32, #tpu.memory_space<vmem>>, vector<2x4xf32>
    %cst_9 = arith.constant dense<0.000000e+00> : vector<2x4xf32>
    %9 = vector.multi_reduction <add>, %3, %cst_9 [2] : vector<2x4x256xf32> to vector<2x4xf32>
    %10 = arith.addf %8, %9 : vector<2x4xf32>
    %c0_10 = arith.constant 0 : index
    %c0_11 = arith.constant 0 : index
    %11 = vector.load %arg8[%c0_10, %c0_11] : memref<2x4xf32, #tpu.memory_space<vmem>>, vector<2x4xf32>
    tpu.vector_store %arg8[%c0_10, %c0_11], %10 {strides = array<i32>} : memref<2x4xf32, #tpu.memory_space<vmem>>, vector<2x4xf32>,
    %c0_i32_12 = arith.constant 0 : i32
    %12 = arith.cmpi eq, %arg3, %c0_i32_12 : i32
    %13 = arith.extui %12 : i1 to i32
    %c0_i32_13 = arith.constant 0 : i32
    %14 = arith.cmpi ne, %13, %c0_i32_13 : i32
    scf.if %14 {
      %c0_14 = arith.constant 0 : index
      %c0_15 = arith.constant 0 : index
      %15 = vector.load %arg7[%c0_14, %c0_15] : memref<2x4xf32, #tpu.memory_space<vmem>>, vector<2x4xf32>
      %c0_16 = arith.constant 0 : index
      %c0_17 = arith.constant 0 : index
      %c0_18 = arith.constant 0 : index
      %16 = vector.load %arg5[%c0_16, %c0_17, %c0_18] : memref<1x2x4xf32, #tpu.memory_space<vmem>>, vector<1x2x4xf32>
      %17 = vector.shape_cast %16 : vector<1x2x4xf32> to vector<2x4xf32>
      %18 = vector.shape_cast %15 : vector<2x4xf32> to vector<1x2x4xf32>
      tpu.vector_store %arg5[%c0_16, %c0_17, %c0_18], %18 {strides = array<i32>} : memref<1x2x4xf32, #tpu.memory_space<vmem>>, vector<1x2x4xf32>,
      %c0_19 = arith.constant 0 : index
      %c0_20 = arith.constant 0 : index
      %19 = vector.load %arg8[%c0_19, %c0_20] : memref<2x4xf32, #tpu.memory_space<vmem>>, vector<2x4xf32>
      %c0_21 = arith.constant 0 : index
      %c0_22 = arith.constant 0 : index
      %c0_23 = arith.constant 0 : index
      %20 = vector.load %arg6[%c0_21, %c0_22, %c0_23] : memref<1x2x4xf32, #tpu.memory_space<vmem>>, vector<1x2x4xf32>
      %21 = vector.shape_cast %20 : vector<1x2x4xf32> to vector<2x4xf32>
      %22 = vector.shape_cast %19 : vector<2x4xf32> to vector<1x2x4xf32>
      tpu.vector_store %arg6[%c0_21, %c0_22, %c0_23], %22 {strides = array<i32>} : memref<1x2x4xf32, #tpu.memory_space<vmem>>, vector<1x2x4xf32>,
    } else {
    }
    return
  }
  func.func @transform_0(%arg0: i32, %arg1: i32, %arg2: i32, %arg3: i32) -> (i32, i32, i32) {
    %c1_i32 = arith.constant 1 : i32
    %0 = arith.muli %arg0, %c1_i32 : i32
    %1 = arith.addi %0, %arg3 : i32
    %c0_i32 = arith.constant 0 : i32
    return %arg1, %arg2, %1 : i32, i32, i32
  }
  func.func @transform_1(%arg0: i32, %arg1: i32, %arg2: i32, %arg3: i32) -> (i32, i32, i32) {
    %c0_i32 = arith.constant 0 : i32
    return %arg0, %arg1, %arg2 : i32, i32, i32
  }
  func.func @transform_2(%arg0: i32, %arg1: i32, %arg2: i32, %arg3: i32) -> (i32, i32, i32) {
    %c0_i32 = arith.constant 0 : i32
    return %arg0, %arg1, %arg2 : i32, i32, i32
  }
}

</mosaic_0001>

<llo_original>
// kernel: tpu_custom_call.1
$region0: #{tpu_custom_call.1}
  #allocation0 [shape = 'u32[]', space=smem, size = 0x4, offset = 0x4, fixed_abs, tag = 'smem constant byte address 0x4 - core index']
  #allocation1 [shape = 'u32[72,128]{1,0:T(1,128)}', space=vmem, size = 0x9000, scoped, tag = 'internal scratch']
  #allocation2 [shape = 'f32[2,4]{1,0:T(2,128)}', space=vmem, size = 0x400, scoped, tag = 'scratch operand']
  #allocation3 [shape = 'f32[2,4]{1,0:T(2,128)}', space=vmem, size = 0x400, scoped, tag = 'scratch operand']
  %s0 = inlined_call_operand.hbm [shape: f32[2,4,256], index: 0, kind: input, shape index: {}]
  %s1 = inlined_call_operand.hbm [shape: f32[1,2,4], index: 1, kind: output, shape index: {0}]
  %s2 = inlined_call_operand.hbm [shape: f32[1,2,4], index: 2, kind: output, shape index: {1}]
  %3 = xla_tuple %s1, %s2
  %s4 = sld [smem:[#allocation0]]
  $region34: #{tpu_custom_call.1} parent=0
    _
  %s6 = ssub.s32 1, %s4
  %s7 = scalar_select 0, %s6, %s4
  $region1: #{tpu_custom_call.1} parent=0
    #allocation4 [shape = 'u8[8192]{0}', space=vmem, size = 0x2000, scoped, tag = 'input window, operand 0, single buffered']
    #allocation5 [shape = 's32[1]{0}', space=sflag, size = 0x4, scoped, tag = 'scoped memory for tpu_custom_call.1']
    #allocation6 [shape = 's32[1]{0}', space=sflag, size = 0x4, scoped, tag = 'scoped memory for tpu_custom_call.1']
    #allocation7 [shape = 'u8[1024]{0}', space=vmem, size = 0x400, scoped, tag = 'output window, operand 0, single buffered']
    #allocation8 [shape = 'u8[1024]{0}', space=vmem, size = 0x400, scoped, tag = 'output window, operand 1, single buffered']
    #allocation9 [shape = 's32[1]{0}', space=sflag, size = 0x4, scoped, tag = 'scoped memory for tpu_custom_call.1']
    %8 = vsyncpa [#allocation5], 0
    %9 = vsyncpa [#allocation6], 0
    %10 = vsyncpa [#allocation9], 0
    // Predicated region
    $region2: #{tpu_custom_call.1} parent=1 // pred_check
      _
    $region3: #{tpu_custom_call.1} parent=1 // pred_check_branch
      %12 = sbr.rel (0) target = $region5
    $region4: #{tpu_custom_call.1} parent=1 // pred_region
      %s13 = sadd.s32 0, 0
      %s14 = smul.u32 2, %s13
      %16 = vsyncadd [#allocation5], 0
      %s17 = smul.addr %s14, 4
      %s18 = scalar_lea.hbm %s0, %s17
      %s19 = sshll.u32 %s18, 4
      %s20 = int_to_ptr.hbm [resolvable:$true] %s19
      %s21 = sshll.u32 [#allocation4], 4
      %s22 = int_to_ptr.vmem [resolvable:$true] %s21
      %27 = dma.hbm_to_vmem [thread:$0]  %s20, 256, %s22, [#allocation5], 128, 128, 8
    $region5: #{tpu_custom_call.1} parent=1 // pred_fallthru
      _
    // Predicated region
    $region6: #{tpu_custom_call.1} parent=1 // pred_check
      _
    $region7: #{tpu_custom_call.1} parent=1 // pred_check_branch
      %29 = sbr.rel (0) target = $region9
    $region8: #{tpu_custom_call.1} parent=1 // pred_region
      %31 = dma.done [#allocation5], 256
    $region9: #{tpu_custom_call.1} parent=1 // pred_fallthru
      _
    %s32 = sadd.s32 0, 0
    %s33 = smul.u32 2, %s32
    %p34 = scmp.eq.s32.totalorder 0, 0
    // Predicated region
    $region10: #{tpu_custom_call.1} parent=1 // pred_check
      %p35 = pneg %p34
    $region11: #{tpu_custom_call.1} parent=1 // pred_check_branch
      %37 = sbr.rel (%p35) target = $region13
    $region12: #{tpu_custom_call.1} parent=1 // pred_region
      %vm38 = vcmask 25600
      %39 = vst.msk [vmem:[#allocation2] sm:$0x3] %vm38, -inf
      %40 = vst.msk [vmem:[#allocation3] sm:$0x3] %vm38, 0.0
    $region13: #{tpu_custom_call.1} parent=1 // pred_fallthru
      _
    %v41 = vld [vmem:[#allocation4] sm:$0xff]
    %v42 = vld [vmem:[#allocation4 + $0x8] sm:$0xff]
    %v43 = vld [vmem:[#allocation2] sm:$0x3]
    %46 = vst [vmem:[#allocation1] ss:$2 sm:$0xff] %v41
    %v47 = vld.sshfl [vmem:[#allocation1] sm:$0xff pattern:$0x75316420]
    %v48 = vld.sshfl [vmem:[#allocation1 + $0x8] sm:$0xff pattern:$0x75316420]
    %s49 = scalar_lea.vmem [#allocation1], 16
    %50 = vst [vmem:[%s49] ss:$2 sm:$0xff] %v42
    %v51 = vld.sshfl [vmem:[#allocation1 + $0x10] sm:$0xff pattern:$0x75316420]
    %v52 = vld.sshfl [vmem:[#allocation1 + $0x18] sm:$0xff pattern:$0x75316420]
    %vm57 = vcmask 1043456
    %v58 = vsel %vm57, %v47, -inf
    %v59 = vsel %vm57, %v48, -inf
    %v60 = vmax.f32 %v58, %v59
    %61 = vmax.xlane.f32.xlu0 %v60
    %v62 = vpop.xlane.xlu0 %61
    %v63 = vsel %vm57, %v51, -inf
    %v64 = vsel %vm57, %v52, -inf
    %v65 = vmax.f32 %v63, %v64
    %66 = vmax.xlane.f32.xlu0 %v65
    %v67 = vpop.xlane.xlu0 %66
    %v70 = vlaneseq
    %v71 = vand.u32 %v70, 127
    %v72 = vperm.slane %v62, %v71
    %v73 = vperm.slane %v67, %v71
    %vm74 = vcmask 1041409
    %v75 = vsel %vm74, %v73, %v72
    %v77 = vmax.f32 %v43, %v75
    %vm78 = vcmask 25600
    %79 = vst.msk [vmem:[#allocation2] sm:$0x3] %vm78, %v77
    %v80 = vld [vmem:[#allocation3] sm:$0x3]
    %81 = vst [vmem:[#allocation1] ss:$2 sm:$0xff] %v41
    %v82 = vld.sshfl [vmem:[#allocation1] sm:$0xff pattern:$0x75316420]
    %v83 = vld.sshfl [vmem:[#allocation1 + $0x8] sm:$0xff pattern:$0x75316420]
    %s84 = scalar_lea.vmem [#allocation1], 16
    %85 = vst [vmem:[%s84] ss:$2 sm:$0xff] %v42
    %v86 = vld.sshfl [vmem:[#allocation1 + $0x10] sm:$0xff pattern:$0x75316420]
    %v87 = vld.sshfl [vmem:[#allocation1 + $0x18] sm:$0xff pattern:$0x75316420]
    %v92 = vsel %vm57, %v82, 0.0
    %v93 = vsel %vm57, %v83, 0.0
    %v94 = vadd.f32 %v92, %v93
    %95 = vadd.xlane.f32.xlu0 %v94
    %v96 = vpop.xlane.xlu0 %95
    %v97 = vsel %vm57, %v86, 0.0
    %v98 = vsel %vm57, %v87, 0.0
    %v99 = vadd.f32 %v97, %v98
    %100 = vadd.xlane.f32.xlu0 %v99
    %v101 = vpop.xlane.xlu0 %100
    %v104 = vperm.slane %v96, %v71
    %v105 = vperm.slane %v101, %v71
    %v106 = vsel %vm74, %v105, %v104
    %v108 = vadd.f32 %v80, %v106
    %109 = vst.msk [vmem:[#allocation3] sm:$0x3] %vm78, %v108
    // Predicated region
    $region14: #{tpu_custom_call.1} parent=1 // pred_check
      %p110 = pneg %p34
    $region15: #{tpu_custom_call.1} parent=1 // pred_check_branch
      %112 = sbr.rel (%p110) target = $region17
    $region16: #{tpu_custom_call.1} parent=1 // pred_region
      %v113 = vld [vmem:[#allocation2] sm:$0x3]
      %114 = vst.msk [vmem:[#allocation7] sm:$0x3] %vm78, %v113
      %v115 = vld [vmem:[#allocation3] sm:$0x3]
      %116 = vst.msk [vmem:[#allocation8] sm:$0x3] %vm78, %v115
    $region17: #{tpu_custom_call.1} parent=1 // pred_fallthru
      _
    // Predicated region
    $region18: #{tpu_custom_call.1} parent=1 // pred_check
      _
    $region19: #{tpu_custom_call.1} parent=1 // pred_check_branch
      %118 = sbr.rel (0) target = $region21
    $region20: #{tpu_custom_call.1} parent=1 // pred_region
      %120 = vsyncadd [#allocation6], 0
      %s122 = sshll.u32 [#allocation7], 4
      %s123 = int_to_ptr.vmem [resolvable:$true] %s122
      %s124 = sshll.u32 %s1, 4
      %s125 = int_to_ptr.hbm [resolvable:$true] %s124
      %127 = dma.vmem_to_hbm [thread:$0]  %s123, 32, %s125, [#allocation6]
    $region21: #{tpu_custom_call.1} parent=1 // pred_fallthru
      _
    // Predicated region
    $region22: #{tpu_custom_call.1} parent=1 // pred_check
      _
    $region23: #{tpu_custom_call.1} parent=1 // pred_check_branch
      %129 = sbr.rel (0) target = $region25
    $region24: #{tpu_custom_call.1} parent=1 // pred_region
      %131 = vsyncadd [#allocation9], 0
      %s133 = sshll.u32 [#allocation8], 4
      %s134 = int_to_ptr.vmem [resolvable:$true] %s133
      %s135 = sshll.u32 %s2, 4
      %s136 = int_to_ptr.hbm [resolvable:$true] %s135
      %138 = dma.vmem_to_hbm [thread:$0]  %s134, 32, %s136, [#allocation9]
    $region25: #{tpu_custom_call.1} parent=1 // pred_fallthru
      _
    // Predicated region
    $region26: #{tpu_custom_call.1} parent=1 // pred_check
      _
    $region27: #{tpu_custom_call.1} parent=1 // pred_check_branch
      %140 = sbr.rel (0) target = $region29
    $region28: #{tpu_custom_call.1} parent=1 // pred_region
      %142 = dma.done [#allocation6], 32
    $region29: #{tpu_custom_call.1} parent=1 // pred_fallthru
      _
    // Predicated region
    $region30: #{tpu_custom_call.1} parent=1 // pred_check
      _
    $region31: #{tpu_custom_call.1} parent=1 // pred_check_branch
      %144 = sbr.rel (0) target = $region33
    $region32: #{tpu_custom_call.1} parent=1 // pred_region
      %146 = dma.done [#allocation9], 32
    $region33: #{tpu_custom_call.1} parent=1 // pred_fallthru
      _
    %147 = vsyncpa [#allocation5], 1
    %148 = vsyncpa [#allocation6], 1
    %149 = vsyncpa [#allocation9], 1

</llo_original>
